<compile_context>
chip_gen: v6e
topology: v6e:2x2x1
jax: 0.10.0
libtpu: 0.0.40
codegen_flags: <defaults>
</compile_context>

<pallas_src>
import functools

import jax
import jax.numpy as jnp
from jax.experimental import pallas as pl
from jax.experimental.pallas import tpu as pltpu


def _round_up(x, m):
    return (x + m - 1) // m * m


def _gat_kernel(self_ref, neigh_ref, adj_ref, m_ref, h_ref, out_ref,
                m_sc, l_sc, acc_sc, *, alpha, concat):
    # Grid: (row tiles of queries, column tiles of neighbors).  The column
    # axis is a reduction handled with an online softmax; the output row tile
    # is written once, at the last column step.
    j = pl.program_id(1)

    @pl.when(j == 0)
    def _init():
        m_sc[...] = jnp.full_like(m_sc, -jnp.inf)
        l_sc[...] = jnp.zeros_like(l_sc)
        acc_sc[...] = jnp.zeros_like(acc_sc)

    # Attention logits for this (T, C) tile:
    #   (T,1) self column + (1,C) neighbor row  ->  * M  ->  LeakyReLU  ->  mask.
    att = (self_ref[...] + neigh_ref[...]) * m_ref[...].astype(jnp.float32)
    att = jnp.where(att > 0, att, alpha * att)                 # LeakyReLU(alpha)
    adj_f = adj_ref[...].astype(jnp.float32)                   # int8 0/1 -> f32
    logits = jnp.where(adj_f > 0, att, jnp.float32(-9e15))

    # Online (flash) softmax accumulation over the neighbor axis, f32.
    m_prev = m_sc[...]
    m_new = jnp.maximum(m_prev, jnp.max(logits, axis=1, keepdims=True))
    scale = jnp.exp(m_prev - m_new)                            # (T, 1)
    p = jnp.exp(logits - m_new)                                # (T, C) f32
    l_sc[...] = scale * l_sc[...] + jnp.sum(p, axis=1, keepdims=True)
    # h is already bf16 (cast once in the wrapper); only p needs a cast here.
    acc_sc[...] = scale * acc_sc[...] + jnp.dot(
        p.astype(h_ref.dtype), h_ref[...],
        preferred_element_type=jnp.float32)                    # (T, F_pad)
    m_sc[...] = m_new

    @pl.when(j == pl.num_programs(1) - 1)
    def _finalize():
        hp = acc_sc[...] * pl.reciprocal(l_sc[...], approx=True)
        if concat:
            # ELU; clamp exp argument so the unselected branch can't overflow.
            hp = jnp.where(hp > 0, hp, jnp.exp(jnp.minimum(hp, 0.0)) - 1.0)
        out_ref[...] = hp.astype(out_ref.dtype)


def gat_layer(x, adj, m, w, a_self, a_neighs, *, alpha=0.2, concat=True,
              row_tile=None, col_tile=None):
    n, fin = x.shape
    fout = w.shape[1]
    f_pad = _round_up(fout, 128)                 # lane-dense output / h / acc

    # Row tile: 128 by default (safe on v7x with 2 TCs; bump to 256 on v6e if
    # desired).  Small N -> a single full-extent tile.
    if row_tile is None:
        row_tile = 128 if n >= 128 else _round_up(n, 32)
    n_pad = _round_up(n, row_tile)
    # Column tile: keep the full neighbor extent in-block for moderate N,
    # switch to online-softmax column tiling for large graphs (VMEM budget,
    # especially v7x's 64 MiB).
    if col_tile is None:
        col_tile = 512 if n > 2048 else 0
    if col_tile == 0 or col_tile >= n_pad:
        col_tile = n_pad
    n_pad = _round_up(n_pad, col_tile)
    assert n_pad % row_tile == 0 and n_pad % col_tile == 0

    x32 = x.astype(jnp.float32)
    w32 = w.astype(jnp.float32)

    # --- Grid-invariant precompute hoisted out of the kernel ---------------
    h32 = x32 @ w32                                        # (N, Fout)  f32
    attn_self = h32 @ a_self.astype(jnp.float32)           # (N, 1)
    attn_neighs = (h32 @ a_neighs.astype(jnp.float32)).T   # (1, N)

    pad_n = n_pad - n
    # Zero padding: padded query rows are fully masked and sliced off; padded
    # neighbor columns get adj=0 -> -9e15 -> softmax weight ~0; padded h
    # columns are zero -> zero output columns, sliced off.
    h_p = jnp.pad(h32, ((0, pad_n), (0, f_pad - fout))).astype(jnp.bfloat16)
    self_p = jnp.pad(attn_self, ((0, pad_n), (0, 0)))
    neigh_p = jnp.pad(attn_neighs, ((0, 0), (0, pad_n)))
    # Narrow HBM streams: adjacency as int8 0/1 mask, M as bf16.
    adj_p = jnp.pad((adj > 0).astype(jnp.int8), ((0, pad_n), (0, pad_n)))
    m_p = jnp.pad(m.astype(jnp.bfloat16), ((0, pad_n), (0, pad_n)))

    grid = (n_pad // row_tile, n_pad // col_tile)
    num_row_tiles = grid[0]

    kernel = functools.partial(_gat_kernel, alpha=alpha, concat=concat)

    # Explicit scoped-VMEM limit (v5e default is only 16 MiB); keep headroom
    # under v7x's 64 MiB physical VMEM.
    vmem_bytes = (
        2 * row_tile * col_tile * (1 + 2)            # adj(int8)+M(bf16) dbl-buf
        + 2 * col_tile * f_pad * 2                   # h tile (bf16) dbl-buf
        + 2 * row_tile * f_pad * 4                   # out tile (f32) dbl-buf
        + row_tile * (f_pad + 2) * 4                 # acc / m / l scratch
        + 2 * (row_tile + col_tile) * 4 * 2          # logit vectors
        + 8 * row_tile * col_tile * 4)               # f32 temporaries headroom
    vmem_limit = int(min(max(vmem_bytes, 32 * 1024 * 1024), 60 * 1024 * 1024))

    cost = pl.CostEstimate(
        flops=int(2 * n_pad * n_pad * f_pad + 12 * n_pad * n_pad),
        transcendentals=int(n_pad * n_pad),
        bytes_accessed=int(n_pad * n_pad * 3
                           + num_row_tiles * n_pad * f_pad * 2
                           + n_pad * f_pad * 4
                           + n_pad * 8))

    out = pl.pallas_call(
        kernel,
        out_shape=jax.ShapeDtypeStruct((n_pad, f_pad), jnp.float32),
        grid_spec=pltpu.PrefetchScalarGridSpec(
            num_scalar_prefetch=0,
            grid=grid,
            in_specs=[
                pl.BlockSpec((row_tile, 1), lambda i, j: (i, 0)),         # attn_self
                pl.BlockSpec((1, col_tile), lambda i, j: (0, j)),         # attn_neighs
                pl.BlockSpec((row_tile, col_tile), lambda i, j: (i, j)),  # adj (i8)
                pl.BlockSpec((row_tile, col_tile), lambda i, j: (i, j)),  # M (bf16)
                pl.BlockSpec((col_tile, f_pad), lambda i, j: (j, 0)),     # h (bf16)
            ],
            out_specs=pl.BlockSpec((row_tile, f_pad), lambda i, j: (i, 0)),
            scratch_shapes=[
                pltpu.VMEM((row_tile, 1), jnp.float32),       # running max
                pltpu.VMEM((row_tile, 1), jnp.float32),       # running denom
                pltpu.VMEM((row_tile, f_pad), jnp.float32),   # output accumulator
            ]),
        compiler_params=pltpu.CompilerParams(
            dimension_semantics=("parallel", "arbitrary"),
            vmem_limit_bytes=vmem_limit),
        cost_estimate=cost,
    )(self_p, neigh_p, adj_p, m_p, h_p)

    return out[:n, :fout]


def gat_reference(x, adj, m, w, a_self, a_neighs, *, alpha=0.2, concat=True):
    """Plain-JAX reference mirroring the kernel math (bf16 M stream, bf16 MXU
    operands in attention@h with f32 accumulation)."""
    h = x.astype(jnp.float32) @ w.astype(jnp.float32)
    attn_self = h @ a_self.astype(jnp.float32)
    attn_neighs = h @ a_neighs.astype(jnp.float32)
    m_q = m.astype(jnp.bfloat16).astype(jnp.float32)
    att = (attn_self + attn_neighs.T) * m_q
    att = jnp.where(att > 0, att, alpha * att)
    logits = jnp.where(adj > 0, att, -9e15)
    p = jax.nn.softmax(logits, axis=1)
    hp = jnp.dot(p.astype(jnp.bfloat16), h.astype(jnp.bfloat16),
                 preferred_element_type=jnp.float32)
    if concat:
        hp = jnp.where(hp > 0, hp, jnp.exp(jnp.minimum(hp, 0.0)) - 1.0)
    return hp


def xavier_uniform(key, shape, gain=1.414):
    fan_in, fan_out = shape[0], shape[1]
    bound = gain * jnp.sqrt(6.0 / (fan_in + fan_out))
    return jax.random.uniform(key, shape, jnp.float32, -bound, bound)


def _make_inputs(key, n, fin, fout):
    k_x, k_adj, k_m, k_w, k_as, k_an = jax.random.split(key, 6)
    x = jax.random.normal(k_x, (n, fin), jnp.float32)
    adj_rand = jax.random.uniform(k_adj, (n, n), jnp.float32)
    adj = (adj_rand > 0.7).astype(jnp.float32)
    adj = jnp.maximum(adj, adj.T)
    adj = jnp.maximum(adj, jnp.eye(n, dtype=jnp.float32))  # self loops
    m_mat = jax.random.uniform(k_m, (n, n), jnp.float32)
    w = xavier_uniform(k_w, (fin, fout))
    a_self = xavier_uniform(k_as, (fout, 1))
    a_neighs = xavier_uniform(k_an, (fout, 1))
    return x, adj, m_mat, w, a_self, a_neighs


if __name__ == "__main__":
    key = jax.random.PRNGKey(0)
    k1, k2 = jax.random.split(key)

    # Cases: single-tile, concat=False path, multi-row-tile with padding, and
    # a forced multi-column-tile case exercising the online-softmax path.
    cases = [
        dict(key=k1, n=64, fin=16, fout=32, concat=True, col_tile=None),
        dict(key=k1, n=64, fin=16, fout=32, concat=False, col_tile=None),
        dict(key=k2, n=192, fin=24, fout=40, concat=True, col_tile=None),
        dict(key=k2, n=192, fin=24, fout=40, concat=True, col_tile=128),
    ]
    for c in cases:
        x, adj, m_mat, w, a_s, a_n = _make_inputs(c["key"], c["n"],
                                                  c["fin"], c["fout"])
        out = gat_layer(x, adj, m_mat, w, a_s, a_n, alpha=0.2,
                        concat=c["concat"], col_tile=c["col_tile"])
        jax.block_until_ready(out)
        ref = gat_reference(x, adj, m_mat, w, a_s, a_n, alpha=0.2,
                            concat=c["concat"])
        assert out.shape == (c["n"], c["fout"]), (out.shape, c)
        assert bool(jnp.all(jnp.isfinite(out)))
        # Tolerance covers bf16 MXU operands, bf16 M stream and the
        # approximate EUP reciprocal used for the softmax normalization.
        err = float(jnp.max(jnp.abs(out - ref)))
        assert jnp.allclose(out, ref, atol=1e-2, rtol=1e-2), (
            f"mismatch vs reference for case {c}: max abs diff {err}")

    print("KERNEL_OK")
</pallas_src>

<mosaic_0001>
module attributes {stable_mosaic.version = 11 : i64} {
  func.func @_gat_kernel(%arg0: i32, %arg1: i32, %arg2: memref<64x1xf32, #tpu.memory_space<vmem>>, %arg3: memref<1x64xf32, #tpu.memory_space<vmem>>, %arg4: memref<64x64xi8, #tpu.memory_space<vmem>>, %arg5: memref<64x64xbf16, #tpu.memory_space<vmem>>, %arg6: memref<64x128xbf16, #tpu.memory_space<vmem>>, %arg7: memref<64x128xf32, #tpu.memory_space<vmem>>, %arg8: memref<64x1xf32, #tpu.memory_space<vmem>>, %arg9: memref<64x1xf32, #tpu.memory_space<vmem>>, %arg10: memref<64x128xf32, #tpu.memory_space<vmem>>) attributes {dimension_semantics = [#tpu.dimension_semantics<parallel>, #tpu.dimension_semantics<arbitrary>], iteration_bounds = array<i64: 1, 1>, scalar_prefetch = 0 : i64, scratch_operands = 3 : i64, tpu.core_type = #tpu.core_type<tc>, window_params = [{transform_indices = @transform_0, window_bounds = array<i64: 64, 1>}, {transform_indices = @transform_1, window_bounds = array<i64: 1, 64>}, {transform_indices = @transform_2, window_bounds = array<i64: 64, 64>}, {transform_indices = @transform_3, window_bounds = array<i64: 64, 64>}, {transform_indices = @transform_4, window_bounds = array<i64: 64, 128>}, {transform_indices = @transform_5, window_bounds = array<i64: 64, 128>}]} {
    %c0_i32 = arith.constant 0 : i32
    %0 = arith.cmpi eq, %arg1, %c0_i32 : i32
    %1 = arith.extui %0 : i1 to i32
    %c0_i32_0 = arith.constant 0 : i32
    %2 = arith.cmpi ne, %1, %c0_i32_0 : i32
    scf.if %2 {
      %cst_30 = arith.constant 0xFF800000 : f32
      %49 = vector.broadcast %cst_30 : f32 to vector<64x1xf32>
      %c0_31 = arith.constant 0 : index
      %c0_32 = arith.constant 0 : index
      %50 = vector.load %arg8[%c0_31, %c0_32] : memref<64x1xf32, #tpu.memory_space<vmem>>, vector<64x1xf32>
      tpu.vector_store %arg8[%c0_31, %c0_32], %49 {strides = array<i32>} : memref<64x1xf32, #tpu.memory_space<vmem>>, vector<64x1xf32>,
      %cst_33 = arith.constant 0.000000e+00 : f32
      %51 = vector.broadcast %cst_33 : f32 to vector<64x1xf32>
      %c0_34 = arith.constant 0 : index
      %c0_35 = arith.constant 0 : index
      %52 = vector.load %arg9[%c0_34, %c0_35] : memref<64x1xf32, #tpu.memory_space<vmem>>, vector<64x1xf32>
      tpu.vector_store %arg9[%c0_34, %c0_35], %51 {strides = array<i32>} : memref<64x1xf32, #tpu.memory_space<vmem>>, vector<64x1xf32>,
      %cst_36 = arith.constant 0.000000e+00 : f32
      %53 = vector.broadcast %cst_36 : f32 to vector<64x128xf32>
      %c0_37 = arith.constant 0 : index
      %c0_38 = arith.constant 0 : index
      %54 = vector.load %arg10[%c0_37, %c0_38] : memref<64x128xf32, #tpu.memory_space<vmem>>, vector<64x128xf32>
      tpu.vector_store %arg10[%c0_37, %c0_38], %53 {strides = array<i32>} : memref<64x128xf32, #tpu.memory_space<vmem>>, vector<64x128xf32>,
    } else {
    }
    %c0 = arith.constant 0 : index
    %c0_1 = arith.constant 0 : index
    %3 = vector.load %arg2[%c0, %c0_1] : memref<64x1xf32, #tpu.memory_space<vmem>>, vector<64x1xf32>
    %c0_2 = arith.constant 0 : index
    %c0_3 = arith.constant 0 : index
    %4 = vector.load %arg3[%c0_2, %c0_3] : memref<1x64xf32, #tpu.memory_space<vmem>>, vector<1x64xf32>
    %5 = vector.broadcast %3 : vector<64x1xf32> to vector<64x64xf32>
    %6 = vector.broadcast %4 : vector<1x64xf32> to vector<64x64xf32>
    %7 = arith.addf %5, %6 : vector<64x64xf32>
    %c0_4 = arith.constant 0 : index
    %c0_5 = arith.constant 0 : index
    %8 = vector.load %arg5[%c0_4, %c0_5] : memref<64x64xbf16, #tpu.memory_space<vmem>>, vector<64x64xbf16>
    %9 = arith.extf %8 : vector<64x64xbf16> to vector<64x64xf32>
    %10 = arith.mulf %7, %9 : vector<64x64xf32>
    %cst = arith.constant 0.000000e+00 : f32
    %11 = vector.broadcast %cst : f32 to vector<64x64xf32>
    %12 = arith.cmpf ogt, %10, %11 : vector<64x64xf32>
    %cst_6 = arith.constant 2.000000e-01 : f32
    %13 = vector.broadcast %cst_6 : f32 to vector<64x64xf32>
    %14 = arith.mulf %13, %10 : vector<64x64xf32>
    %15 = arith.select %12, %10, %14 : vector<64x64xi1>, vector<64x64xf32>
    %c0_7 = arith.constant 0 : index
    %c0_8 = arith.constant 0 : index
    %16 = vector.load %arg4[%c0_7, %c0_8] : memref<64x64xi8, #tpu.memory_space<vmem>>, vector<64x64xi8>
    %17 = arith.sitofp %16 : vector<64x64xi8> to vector<64x64xf32>
    %cst_9 = arith.constant 0.000000e+00 : f32
    %18 = vector.broadcast %cst_9 : f32 to vector<64x64xf32>
    %19 = arith.cmpf ogt, %17, %18 : vector<64x64xf32>
    %cst_10 = arith.constant -9.000000e+15 : f32
    %20 = vector.broadcast %cst_10 : f32 to vector<64x64xf32>
    %21 = arith.select %19, %15, %20 : vector<64x64xi1>, vector<64x64xf32>
    %c0_11 = arith.constant 0 : index
    %c0_12 = arith.constant 0 : index
    %22 = vector.load %arg8[%c0_11, %c0_12] : memref<64x1xf32, #tpu.memory_space<vmem>>, vector<64x1xf32>
    %cst_13 = arith.constant dense<0xFF800000> : vector<64xf32>
    %23 = vector.multi_reduction <maximumf>, %21, %cst_13 [1] : vector<64x64xf32> to vector<64xf32>
    %24 = vector.shape_cast %23 : vector<64xf32> to vector<64x1xf32>
    %25 = arith.maximumf %22, %24 : vector<64x1xf32>
    %26 = arith.subf %22, %25 : vector<64x1xf32>
    %27 = math.exp %26 : vector<64x1xf32>
    %28 = vector.broadcast %25 : vector<64x1xf32> to vector<64x64xf32>
    %29 = arith.subf %21, %28 : vector<64x64xf32>
    %30 = math.exp %29 : vector<64x64xf32>
    %c0_14 = arith.constant 0 : index
    %c0_15 = arith.constant 0 : index
    %31 = vector.load %arg9[%c0_14, %c0_15] : memref<64x1xf32, #tpu.memory_space<vmem>>, vector<64x1xf32>
    %32 = arith.mulf %27, %31 : vector<64x1xf32>
    %cst_16 = arith.constant dense<0.000000e+00> : vector<64xf32>
    %33 = vector.multi_reduction <add>, %30, %cst_16 [1] : vector<64x64xf32> to vector<64xf32>
    %34 = vector.shape_cast %33 : vector<64xf32> to vector<64x1xf32>
    %35 = arith.addf %32, %34 : vector<64x1xf32>
    %c0_17 = arith.constant 0 : index
    %c0_18 = arith.constant 0 : index
    %36 = vector.load %arg9[%c0_17, %c0_18] : memref<64x1xf32, #tpu.memory_space<vmem>>, vector<64x1xf32>
    tpu.vector_store %arg9[%c0_17, %c0_18], %35 {strides = array<i32>} : memref<64x1xf32, #tpu.memory_space<vmem>>, vector<64x1xf32>,
    %c0_19 = arith.constant 0 : index
    %c0_20 = arith.constant 0 : index
    %37 = vector.load %arg10[%c0_19, %c0_20] : memref<64x128xf32, #tpu.memory_space<vmem>>, vector<64x128xf32>
    %38 = vector.broadcast %27 : vector<64x1xf32> to vector<64x128xf32>
    %39 = arith.mulf %38, %37 : vector<64x128xf32>
    %40 = arith.truncf %30 : vector<64x64xf32> to vector<64x64xbf16>
    %c0_21 = arith.constant 0 : index
    %c0_22 = arith.constant 0 : index
    %41 = vector.load %arg6[%c0_21, %c0_22] : memref<64x128xbf16, #tpu.memory_space<vmem>>, vector<64x128xbf16>
    %cst_23 = arith.constant dense<0.000000e+00> : vector<64x128xf32>
    %42 = tpu.matmul %40, %41, %cst_23 {dimension_numbers = #tpu.dot_dimension_numbers<[1], [0], [0], [1], [0, 0, 1, 1], [], []>} : vector<64x64xbf16>, vector<64x128xbf16>, vector<64x128xf32> -> vector<64x128xf32>
    %43 = arith.addf %39, %42 : vector<64x128xf32>
    %c0_24 = arith.constant 0 : index
    %c0_25 = arith.constant 0 : index
    %44 = vector.load %arg10[%c0_24, %c0_25] : memref<64x128xf32, #tpu.memory_space<vmem>>, vector<64x128xf32>
    tpu.vector_store %arg10[%c0_24, %c0_25], %43 {strides = array<i32>} : memref<64x128xf32, #tpu.memory_space<vmem>>, vector<64x128xf32>,
    %c0_26 = arith.constant 0 : index
    %c0_27 = arith.constant 0 : index
    %45 = vector.load %arg8[%c0_26, %c0_27] : memref<64x1xf32, #tpu.memory_space<vmem>>, vector<64x1xf32>
    tpu.vector_store %arg8[%c0_26, %c0_27], %25 {strides = array<i32>} : memref<64x1xf32, #tpu.memory_space<vmem>>, vector<64x1xf32>,
    %c0_i32_28 = arith.constant 0 : i32
    %46 = arith.cmpi eq, %arg1, %c0_i32_28 : i32
    %47 = arith.extui %46 : i1 to i32
    %c0_i32_29 = arith.constant 0 : i32
    %48 = arith.cmpi ne, %47, %c0_i32_29 : i32
    scf.if %48 {
      %c0_30 = arith.constant 0 : index
      %c0_31 = arith.constant 0 : index
      %49 = vector.load %arg10[%c0_30, %c0_31] : memref<64x128xf32, #tpu.memory_space<vmem>>, vector<64x128xf32>
      %c0_32 = arith.constant 0 : index
      %c0_33 = arith.constant 0 : index
      %50 = vector.load %arg9[%c0_32, %c0_33] : memref<64x1xf32, #tpu.memory_space<vmem>>, vector<64x1xf32>
      %51 = tpu.reciprocal %50 {approx = true} : vector<64x1xf32> -> vector<64x1xf32>
      %52 = vector.broadcast %51 : vector<64x1xf32> to vector<64x128xf32>
      %53 = arith.mulf %49, %52 : vector<64x128xf32>
      %cst_34 = arith.constant 0.000000e+00 : f32
      %54 = vector.broadcast %cst_34 : f32 to vector<64x128xf32>
      %55 = arith.cmpf ogt, %53, %54 : vector<64x128xf32>
      %cst_35 = arith.constant 0.000000e+00 : f32
      %56 = vector.broadcast %cst_35 : f32 to vector<64x128xf32>
      %57 = arith.minimumf %53, %56 : vector<64x128xf32>
      %58 = math.exp %57 : vector<64x128xf32>
      %cst_36 = arith.constant 1.000000e+00 : f32
      %59 = vector.broadcast %cst_36 : f32 to vector<64x128xf32>
      %60 = arith.subf %58, %59 : vector<64x128xf32>
      %61 = arith.select %55, %53, %60 : vector<64x128xi1>, vector<64x128xf32>
      %c0_37 = arith.constant 0 : index
      %c0_38 = arith.constant 0 : index
      %62 = vector.load %arg7[%c0_37, %c0_38] : memref<64x128xf32, #tpu.memory_space<vmem>>, vector<64x128xf32>
      tpu.vector_store %arg7[%c0_37, %c0_38], %61 {strides = array<i32>} : memref<64x128xf32, #tpu.memory_space<vmem>>, vector<64x128xf32>,
    } else {
    }
    return
  }
  func.func @transform_0(%arg0: i32, %arg1: i32) -> (i32, i32) {
    %c0_i32 = arith.constant 0 : i32
    %c0_i32_0 = arith.constant 0 : i32
    return %arg0, %c0_i32 : i32, i32
  }
  func.func @transform_1(%arg0: i32, %arg1: i32) -> (i32, i32) {
    %c0_i32 = arith.constant 0 : i32
    %c0_i32_0 = arith.constant 0 : i32
    return %c0_i32, %arg1 : i32, i32
  }
  func.func @transform_2(%arg0: i32, %arg1: i32) -> (i32, i32) {
    %c0_i32 = arith.constant 0 : i32
    return %arg0, %arg1 : i32, i32
  }
  func.func @transform_3(%arg0: i32, %arg1: i32) -> (i32, i32) {
    %c0_i32 = arith.constant 0 : i32
    return %arg0, %arg1 : i32, i32
  }
  func.func @transform_4(%arg0: i32, %arg1: i32) -> (i32, i32) {
    %c0_i32 = arith.constant 0 : i32
    %c0_i32_0 = arith.constant 0 : i32
    return %arg1, %c0_i32 : i32, i32
  }
  func.func @transform_5(%arg0: i32, %arg1: i32) -> (i32, i32) {
    %c0_i32 = arith.constant 0 : i32
    %c0_i32_0 = arith.constant 0 : i32
    return %arg0, %c0_i32 : i32, i32
  }
}

</mosaic_0001>

<llo_original>
// kernel: tpu_custom_call.1
$region0: #{tpu_custom_call.1}
  #allocation0 [shape = 'u32[]', space=smem, size = 0x4, offset = 0x4, fixed_abs, tag = 'smem constant byte address 0x4 - core index']
  #allocation1 [shape = 'u32[144,128]{1,0:T(1,128)}', space=vmem, size = 0x12000, scoped, tag = 'internal scratch']
  #allocation2 [shape = 'f32[64,1]{1,0:T(8,128)}', space=vmem, size = 0x8000, scoped, tag = 'scratch operand']
  #allocation3 [shape = 'f32[64,1]{1,0:T(8,128)}', space=vmem, size = 0x8000, scoped, tag = 'scratch operand']
  #allocation4 [shape = 'f32[64,128]{1,0:T(8,128)}', space=vmem, size = 0x8000, scoped, tag = 'scratch operand']
  %s0 = inlined_call_operand.vmem [shape: f32[64,1], index: 0, kind: input, shape index: {}]
  %s1 = inlined_call_operand.vmem [shape: f32[1,64], index: 1, kind: input, shape index: {}]
  %s2 = inlined_call_operand.hbm [shape: s8[64,64], index: 2, kind: input, shape index: {}]
  %s3 = inlined_call_operand.vmem [shape: bf16[64,64], index: 3, kind: input, shape index: {}]
  %s4 = inlined_call_operand.vmem [shape: bf16[64,128], index: 4, kind: input, shape index: {}]
  %s5 = inlined_call_operand.hbm [shape: f32[64,128], index: 5, kind: output, shape index: {}]
  %s6 = sld [smem:[#allocation0]]
  $region42: #{tpu_custom_call.1} parent=0
    _
  %s8 = ssub.s32 1, %s6
  %s9 = scalar_select 0, %s8, %s6
  $region1: #{tpu_custom_call.1} parent=0
    #allocation5 [shape = 'u8[8192]{0}', space=vmem, size = 0x2000, scoped, tag = 'input window, operand 2, single buffered']
    #allocation6 [shape = 's32[1]{0}', space=sflag, size = 0x4, scoped, tag = 'scoped memory for tpu_custom_call.1']
    #allocation7 [shape = 's32[1]{0}', space=sflag, size = 0x4, scoped, tag = 'scoped memory for tpu_custom_call.1']
    #allocation8 [shape = 'u8[32768]{0}', space=vmem, size = 0x8000, scoped, tag = 'output window, operand 0, single buffered']
    %10 = vsyncpa [#allocation6], 0
    %11 = vsyncpa [#allocation7], 0
    // Predicated region
    $region2: #{tpu_custom_call.1} parent=1 // pred_check
      _
    $region3: #{tpu_custom_call.1} parent=1 // pred_check_branch
      %13 = sbr.rel (0) target = $region5
    $region4: #{tpu_custom_call.1} parent=1 // pred_region
      _
    $region5: #{tpu_custom_call.1} parent=1 // pred_fallthru
      _
    // Predicated region
    $region6: #{tpu_custom_call.1} parent=1 // pred_check
      _
    $region7: #{tpu_custom_call.1} parent=1 // pred_check_branch
      %15 = sbr.rel (0) target = $region9
    $region8: #{tpu_custom_call.1} parent=1 // pred_region
      _
    $region9: #{tpu_custom_call.1} parent=1 // pred_fallthru
      _
    // Predicated region
    $region10: #{tpu_custom_call.1} parent=1 // pred_check
      _
    $region11: #{tpu_custom_call.1} parent=1 // pred_check_branch
      %17 = sbr.rel (0) target = $region13
    $region12: #{tpu_custom_call.1} parent=1 // pred_region
      %s19 = ssub.s32 256, 256
      %20 = vsyncadd [#allocation6], %s19
      %s21 = sshll.u32 [#allocation5], 4
      %s22 = int_to_ptr.vmem [resolvable:$true] %s21
      %27 = dma.hbm_to_vmem [thread:$0]  %s2, 256, %s22, [#allocation6], 128, 128, 8
    $region13: #{tpu_custom_call.1} parent=1 // pred_fallthru
      _
    // Predicated region
    $region14: #{tpu_custom_call.1} parent=1 // pred_check
      _
    $region15: #{tpu_custom_call.1} parent=1 // pred_check_branch
      %29 = sbr.rel (0) target = $region17
    $region16: #{tpu_custom_call.1} parent=1 // pred_region
      _
    $region17: #{tpu_custom_call.1} parent=1 // pred_fallthru
      _
    // Predicated region
    $region18: #{tpu_custom_call.1} parent=1 // pred_check
      _
    $region19: #{tpu_custom_call.1} parent=1 // pred_check_branch
      %31 = sbr.rel (0) target = $region21
    $region20: #{tpu_custom_call.1} parent=1 // pred_region
      _
    $region21: #{tpu_custom_call.1} parent=1 // pred_fallthru
      _
    // Predicated region
    $region22: #{tpu_custom_call.1} parent=1 // pred_check
      _
    $region23: #{tpu_custom_call.1} parent=1 // pred_check_branch
      %33 = sbr.rel (0) target = $region25
    $region24: #{tpu_custom_call.1} parent=1 // pred_region
      %34 = dma.done [#allocation6], 256
    $region25: #{tpu_custom_call.1} parent=1 // pred_fallthru
      _
    %p36 = scmp.eq.s32.totalorder 0, 0
    // Predicated region
    $region26: #{tpu_custom_call.1} parent=1 // pred_check
      %p37 = pneg %p36
    $region27: #{tpu_custom_call.1} parent=1 // pred_check_branch
      %39 = sbr.rel (%p37) target = $region29
    $region28: #{tpu_custom_call.1} parent=1 // pred_region
      %vm40 = vcmask 7168
      %41 = vst.msk [vmem:[#allocation2] sm:$0xff] %vm40, -inf
      %42 = vst.msk [vmem:[#allocation2 + $0x8] sm:$0xff] %vm40, -inf
      %43 = vst.msk [vmem:[#allocation2 + $0x10] sm:$0xff] %vm40, -inf
      %44 = vst.msk [vmem:[#allocation2 + $0x18] sm:$0xff] %vm40, -inf
      %45 = vst.msk [vmem:[#allocation2 + $0x20] sm:$0xff] %vm40, -inf
      %46 = vst.msk [vmem:[#allocation2 + $0x28] sm:$0xff] %vm40, -inf
      %47 = vst.msk [vmem:[#allocation2 + $0x30] sm:$0xff] %vm40, -inf
      %48 = vst.msk [vmem:[#allocation2 + $0x38] sm:$0xff] %vm40, -inf
      %49 = vst.msk [vmem:[#allocation3] sm:$0xff] %vm40, 0.0
      %50 = vst.msk [vmem:[#allocation3 + $0x8] sm:$0xff] %vm40, 0.0
      %51 = vst.msk [vmem:[#allocation3 + $0x10] sm:$0xff] %vm40, 0.0
      %52 = vst.msk [vmem:[#allocation3 + $0x18] sm:$0xff] %vm40, 0.0
      %53 = vst.msk [vmem:[#allocation3 + $0x20] sm:$0xff] %vm40, 0.0
      %54 = vst.msk [vmem:[#allocation3 + $0x28] sm:$0xff] %vm40, 0.0
      %55 = vst.msk [vmem:[#allocation3 + $0x30] sm:$0xff] %vm40, 0.0
      %56 = vst.msk [vmem:[#allocation3 + $0x38] sm:$0xff] %vm40, 0.0
      %57 = vst [vmem:[#allocation4] sm:$0xff] 0.0
      %58 = vst [vmem:[#allocation4 + $0x8] sm:$0xff] 0.0
      %59 = vst [vmem:[#allocation4 + $0x10] sm:$0xff] 0.0
      %60 = vst [vmem:[#allocation4 + $0x18] sm:$0xff] 0.0
      %61 = vst [vmem:[#allocation4 + $0x20] sm:$0xff] 0.0
      %62 = vst [vmem:[#allocation4 + $0x28] sm:$0xff] 0.0
      %63 = vst [vmem:[#allocation4 + $0x30] sm:$0xff] 0.0
      %64 = vst [vmem:[#allocation4 + $0x38] sm:$0xff] 0.0
    $region29: #{tpu_custom_call.1} parent=1 // pred_fallthru
      _
    %v65 = vld [vmem:[%s0] sm:$0xff]
    %v66 = vld [vmem:[%s0 + $0x8] sm:$0xff]
    %v67 = vld [vmem:[%s0 + $0x10] sm:$0xff]
    %v68 = vld [vmem:[%s0 + $0x18] sm:$0xff]
    %v69 = vld [vmem:[%s0 + $0x20] sm:$0xff]
    %v70 = vld [vmem:[%s0 + $0x28] sm:$0xff]
    %v71 = vld [vmem:[%s0 + $0x30] sm:$0xff]
    %v72 = vld [vmem:[%s0 + $0x38] sm:$0xff]
    %v73 = vld [vmem:[%s1] sm:$0x1]
    %75 = vset.pattern.permute.xlu0 0
    %76 = vperm.xlu0 %75, %v65
    %v77 = vpop.permute.xlu0 %76
    %80 = vset.pattern.permute.xlu0 0
    %81 = vperm.xlu0 %80, %v66
    %v82 = vpop.permute.xlu0 %81
    %85 = vset.pattern.permute.xlu0 0
    %86 = vperm.xlu0 %85, %v67
    %v87 = vpop.permute.xlu0 %86
    %90 = vset.pattern.permute.xlu0 0
    %91 = vperm.xlu0 %90, %v68
    %v92 = vpop.permute.xlu0 %91
    %95 = vset.pattern.permute.xlu0 0
    %96 = vperm.xlu0 %95, %v69
    %v97 = vpop.permute.xlu0 %96
    %100 = vset.pattern.permute.xlu0 0
    %101 = vperm.xlu0 %100, %v70
    %v102 = vpop.permute.xlu0 %101
    %105 = vset.pattern.permute.xlu0 0
    %106 = vperm.xlu0 %105, %v71
    %v107 = vpop.permute.xlu0 %106
    %110 = vset.pattern.permute.xlu0 0
    %111 = vperm.xlu0 %110, %v72
    %v112 = vpop.permute.xlu0 %111
    %v115 = vlaneseq
    %v116 = vshrl.u32 %v115, 7
    %v117 = vsub.s32 0, %v116
    %v118 = vrot.slane %v73, %v117
    %v120 = vadd.f32 %v77, %v118
    %v121 = vadd.f32 %v82, %v118
    %v122 = vadd.f32 %v87, %v118
    %v123 = vadd.f32 %v92, %v118
    %v124 = vadd.f32 %v97, %v118
    %v125 = vadd.f32 %v102, %v118
    %v126 = vadd.f32 %v107, %v118
    %v127 = vadd.f32 %v112, %v118
    %v128 = vld [vmem:[%s3] sm:$0xf]
    %v129 = vld [vmem:[%s3 + $0x4] sm:$0xf]
    %v130 = vld [vmem:[%s3 + $0x8] sm:$0xf]
    %v131 = vld [vmem:[%s3 + $0xc] sm:$0xf]
    %v132 = vld [vmem:[%s3 + $0x10] sm:$0xf]
    %v133 = vld [vmem:[%s3 + $0x14] sm:$0xf]
    %v134 = vld [vmem:[%s3 + $0x18] sm:$0xf]
    %v135 = vld [vmem:[%s3 + $0x1c] sm:$0xf]
    %v136 = vunpack.c.l.bf16 %v128
    %v137 = vunpack.c.l.bf16 %v129
    %v138 = vunpack.c.l.bf16 %v130
    %v139 = vunpack.c.l.bf16 %v131
    %v140 = vunpack.c.l.bf16 %v132
    %v141 = vunpack.c.l.bf16 %v133
    %v142 = vunpack.c.l.bf16 %v134
    %v143 = vunpack.c.l.bf16 %v135
    %v144 = vmul.f32 %v120, %v136
    %v145 = vmul.f32 %v121, %v137
    %v146 = vmul.f32 %v122, %v138
    %v147 = vmul.f32 %v123, %v139
    %v148 = vmul.f32 %v124, %v140
    %v149 = vmul.f32 %v125, %v141
    %v150 = vmul.f32 %v126, %v142
    %v151 = vmul.f32 %v127, %v143
    %vm152 = vcmp.gt.f32.partialorder %v144, 0.0
    %vm153 = vcmp.gt.f32.partialorder %v145, 0.0
    %vm154 = vcmp.gt.f32.partialorder %v146, 0.0
    %vm155 = vcmp.gt.f32.partialorder %v147, 0.0
    %vm156 = vcmp.gt.f32.partialorder %v148, 0.0
    %vm157 = vcmp.gt.f32.partialorder %v149, 0.0
    %vm158 = vcmp.gt.f32.partialorder %v150, 0.0
    %vm159 = vcmp.gt.f32.partialorder %v151, 0.0
    %v160 = vmul.f32 %v144, 0.2
    %v161 = vmul.f32 %v145, 0.2
    %v162 = vmul.f32 %v146, 0.2
    %v163 = vmul.f32 %v147, 0.2
    %v164 = vmul.f32 %v148, 0.2
    %v165 = vmul.f32 %v149, 0.2
    %v166 = vmul.f32 %v150, 0.2
    %v167 = vmul.f32 %v151, 0.2
    %v168 = vsel %vm152, %v144, %v160
    %v169 = vsel %vm153, %v145, %v161
    %v170 = vsel %vm154, %v146, %v162
    %v171 = vsel %vm155, %v147, %v163
    %v172 = vsel %vm156, %v148, %v164
    %v173 = vsel %vm157, %v149, %v165
    %v174 = vsel %vm158, %v150, %v166
    %v175 = vsel %vm159, %v151, %v167
    %v176 = vld [vmem:[#allocation5] sm:$0xff]
    %v177 = vld [vmem:[#allocation5 + $0x8] sm:$0xff]
    %v178 = vunpack.c.0.s8 %v176
    %v179 = vunpack.c.1.s8 %v176
    %v180 = vunpack.c.2.s8 %v176
    %v181 = vunpack.c.3.s8 %v176
    %v182 = vunpack.c.0.s8 %v177
    %v183 = vunpack.c.1.s8 %v177
    %v184 = vunpack.c.2.s8 %v177
    %v185 = vunpack.c.3.s8 %v177
    %v186 = vcvt.s32.f32 %v178
    %v187 = vcvt.s32.f32 %v179
    %v188 = vcvt.s32.f32 %v180
    %v189 = vcvt.s32.f32 %v181
    %v190 = vcvt.s32.f32 %v182
    %v191 = vcvt.s32.f32 %v183
    %v192 = vcvt.s32.f32 %v184
    %v193 = vcvt.s32.f32 %v185
    %vm194 = vcmp.gt.f32.partialorder %v186, 0.0
    %vm195 = vcmp.gt.f32.partialorder %v187, 0.0
    %vm196 = vcmp.gt.f32.partialorder %v188, 0.0
    %vm197 = vcmp.gt.f32.partialorder %v189, 0.0
    %vm198 = vcmp.gt.f32.partialorder %v190, 0.0
    %vm199 = vcmp.gt.f32.partialorder %v191, 0.0
    %vm200 = vcmp.gt.f32.partialorder %v192, 0.0
    %vm201 = vcmp.gt.f32.partialorder %v193, 0.0
    %v202 = vsel %vm194, %v168, -9e+15
    %v203 = vsel %vm195, %v169, -9e+15
    %v204 = vsel %vm196, %v170, -9e+15
    %v205 = vsel %vm197, %v171, -9e+15
    %v206 = vsel %vm198, %v172, -9e+15
    %v207 = vsel %vm199, %v173, -9e+15
    %v208 = vsel %vm200, %v174, -9e+15
    %v209 = vsel %vm201, %v175, -9e+15
    %v210 = vld [vmem:[#allocation2] sm:$0xff]
    %v211 = vld [vmem:[#allocation2 + $0x8] sm:$0xff]
    %v212 = vld [vmem:[#allocation2 + $0x10] sm:$0xff]
    %v213 = vld [vmem:[#allocation2 + $0x18] sm:$0xff]
    %v214 = vld [vmem:[#allocation2 + $0x20] sm:$0xff]
    %v215 = vld [vmem:[#allocation2 + $0x28] sm:$0xff]
    %v216 = vld [vmem:[#allocation2 + $0x30] sm:$0xff]
    %v217 = vld [vmem:[#allocation2 + $0x38] sm:$0xff]
    %vm218 = vcmask 523264
    %v219 = vsel %vm218, %v202, -inf
    %220 = vmax.xlane.f32.xlu0 %v219
    %v221 = vpop.xlane.xlu0 %220
    %v222 = vsel %vm218, %v203, -inf
    %223 = vmax.xlane.f32.xlu0 %v222
    %v224 = vpop.xlane.xlu0 %223
    %v225 = vsel %vm218, %v204, -inf
    %226 = vmax.xlane.f32.xlu0 %v225
    %v227 = vpop.xlane.xlu0 %226
    %v228 = vsel %vm218, %v205, -inf
    %229 = vmax.xlane.f32.xlu0 %v228
    %v230 = vpop.xlane.xlu0 %229
    %v231 = vsel %vm218, %v206, -inf
    %232 = vmax.xlane.f32.xlu0 %v231
    %v233 = vpop.xlane.xlu0 %232
    %v234 = vsel %vm218, %v207, -inf
    %235 = vmax.xlane.f32.xlu0 %v234
    %v236 = vpop.xlane.xlu0 %235
    %v237 = vsel %vm218, %v208, -inf
    %238 = vmax.xlane.f32.xlu0 %v237
    %v239 = vpop.xlane.xlu0 %238
    %v240 = vsel %vm218, %v209, -inf
    %241 = vmax.xlane.f32.xlu0 %v240
    %v242 = vpop.xlane.xlu0 %241
    %v243 = vmax.f32 %v210, %v221
    %v244 = vmax.f32 %v211, %v224
    %v245 = vmax.f32 %v212, %v227
    %v246 = vmax.f32 %v213, %v230
    %v247 = vmax.f32 %v214, %v233
    %v248 = vmax.f32 %v215, %v236
    %v249 = vmax.f32 %v216, %v239
    %v250 = vmax.f32 %v217, %v242
    %v251 = vsub.f32 %v210, %v243
    %v252 = vsub.f32 %v211, %v244
    %v253 = vsub.f32 %v212, %v245
    %v254 = vsub.f32 %v213, %v246
    %v255 = vsub.f32 %v214, %v247
    %v256 = vsub.f32 %v215, %v248
    %v257 = vsub.f32 %v216, %v249
    %v258 = vsub.f32 %v217, %v250
    %v259 = vmul.f32 %v251, 1.442695
    %v260 = vpow.pop %v259
    %v261 = vmul.f32 %v252, 1.442695
    %v262 = vpow.pop %v261
    %v263 = vmul.f32 %v253, 1.442695
    %v264 = vpow.pop %v263
    %v265 = vmul.f32 %v254, 1.442695
    %v266 = vpow.pop %v265
    %v267 = vmul.f32 %v255, 1.442695
    %v268 = vpow.pop %v267
    %v269 = vmul.f32 %v256, 1.442695
    %v270 = vpow.pop %v269
    %v271 = vmul.f32 %v257, 1.442695
    %v272 = vpow.pop %v271
    %v273 = vmul.f32 %v258, 1.442695
    %v274 = vpow.pop %v273
    %276 = vset.pattern.permute.xlu0 0
    %277 = vperm.xlu0 %276, %v243
    %v278 = vpop.permute.xlu0 %277
    %281 = vset.pattern.permute.xlu0 0
    %282 = vperm.xlu0 %281, %v244
    %v283 = vpop.permute.xlu0 %282
    %286 = vset.pattern.permute.xlu0 0
    %287 = vperm.xlu0 %286, %v245
    %v288 = vpop.permute.xlu0 %287
    %291 = vset.pattern.permute.xlu0 0
    %292 = vperm.xlu0 %291, %v246
    %v293 = vpop.permute.xlu0 %292
    %296 = vset.pattern.permute.xlu0 0
    %297 = vperm.xlu0 %296, %v247
    %v298 = vpop.permute.xlu0 %297
    %301 = vset.pattern.permute.xlu0 0
    %302 = vperm.xlu0 %301, %v248
    %v303 = vpop.permute.xlu0 %302
    %306 = vset.pattern.permute.xlu0 0
    %307 = vperm.xlu0 %306, %v249
    %v308 = vpop.permute.xlu0 %307
    %311 = vset.pattern.permute.xlu0 0
    %312 = vperm.xlu0 %311, %v250
    %v313 = vpop.permute.xlu0 %312
    %v315 = vsub.f32 %v202, %v278
    %v316 = vsub.f32 %v203, %v283
    %v317 = vsub.f32 %v204, %v288
    %v318 = vsub.f32 %v205, %v293
    %v319 = vsub.f32 %v206, %v298
    %v320 = vsub.f32 %v207, %v303
    %v321 = vsub.f32 %v208, %v308
    %v322 = vsub.f32 %v209, %v313
    %v323 = vmul.f32 %v315, 1.442695
    %v324 = vpow.pop %v323
    %v325 = vmul.f32 %v316, 1.442695
    %v326 = vpow.pop %v325
    %v327 = vmul.f32 %v317, 1.442695
    %v328 = vpow.pop %v327
    %v329 = vmul.f32 %v318, 1.442695
    %v330 = vpow.pop %v329
    %v331 = vmul.f32 %v319, 1.442695
    %v332 = vpow.pop %v331
    %v333 = vmul.f32 %v320, 1.442695
    %v334 = vpow.pop %v333
    %v335 = vmul.f32 %v321, 1.442695
    %v336 = vpow.pop %v335
    %v337 = vmul.f32 %v322, 1.442695
    %v338 = vpow.pop %v337
    %v339 = vld [vmem:[#allocation3] sm:$0xff]
    %v340 = vld [vmem:[#allocation3 + $0x8] sm:$0xff]
    %v341 = vld [vmem:[#allocation3 + $0x10] sm:$0xff]
    %v342 = vld [vmem:[#allocation3 + $0x18] sm:$0xff]
    %v343 = vld [vmem:[#allocation3 + $0x20] sm:$0xff]
    %v344 = vld [vmem:[#allocation3 + $0x28] sm:$0xff]
    %v345 = vld [vmem:[#allocation3 + $0x30] sm:$0xff]
    %v346 = vld [vmem:[#allocation3 + $0x38] sm:$0xff]
    %v347 = vmul.f32 %v260, %v339
    %v348 = vmul.f32 %v262, %v340
    %v349 = vmul.f32 %v264, %v341
    %v350 = vmul.f32 %v266, %v342
    %v351 = vmul.f32 %v268, %v343
    %v352 = vmul.f32 %v270, %v344
    %v353 = vmul.f32 %v272, %v345
    %v354 = vmul.f32 %v274, %v346
    %v355 = vsel %vm218, %v324, 0.0
    %356 = vadd.xlane.f32.xlu0 %v355
    %v357 = vpop.xlane.xlu0 %356
    %v358 = vsel %vm218, %v326, 0.0
    %359 = vadd.xlane.f32.xlu0 %v358
    %v360 = vpop.xlane.xlu0 %359
    %v361 = vsel %vm218, %v328, 0.0
    %362 = vadd.xlane.f32.xlu0 %v361
    %v363 = vpop.xlane.xlu0 %362
    %v364 = vsel %vm218, %v330, 0.0
    %365 = vadd.xlane.f32.xlu0 %v364
    %v366 = vpop.xlane.xlu0 %365
    %v367 = vsel %vm218, %v332, 0.0
    %368 = vadd.xlane.f32.xlu0 %v367
    %v369 = vpop.xlane.xlu0 %368
    %v370 = vsel %vm218, %v334, 0.0
    %371 = vadd.xlane.f32.xlu0 %v370
    %v372 = vpop.xlane.xlu0 %371
    %v373 = vsel %vm218, %v336, 0.0
    %374 = vadd.xlane.f32.xlu0 %v373
    %v375 = vpop.xlane.xlu0 %374
    %v376 = vsel %vm218, %v338, 0.0
    %377 = vadd.xlane.f32.xlu0 %v376
    %v378 = vpop.xlane.xlu0 %377
    %v379 = vadd.f32 %v347, %v357
    %v380 = vadd.f32 %v348, %v360
    %v381 = vadd.f32 %v349, %v363
    %v382 = vadd.f32 %v350, %v366
    %v383 = vadd.f32 %v351, %v369
    %v384 = vadd.f32 %v352, %v372
    %v385 = vadd.f32 %v353, %v375
    %v386 = vadd.f32 %v354, %v378
    %vm387 = vcmask 7168
    %388 = vst.msk [vmem:[#allocation3] sm:$0xff] %vm387, %v379
    %389 = vst.msk [vmem:[#allocation3 + $0x8] sm:$0xff] %vm387, %v380
    %390 = vst.msk [vmem:[#allocation3 + $0x10] sm:$0xff] %vm387, %v381
    %391 = vst.msk [vmem:[#allocation3 + $0x18] sm:$0xff] %vm387, %v382
    %392 = vst.msk [vmem:[#allocation3 + $0x20] sm:$0xff] %vm387, %v383
    %393 = vst.msk [vmem:[#allocation3 + $0x28] sm:$0xff] %vm387, %v384
    %394 = vst.msk [vmem:[#allocation3 + $0x30] sm:$0xff] %vm387, %v385
    %395 = vst.msk [vmem:[#allocation3 + $0x38] sm:$0xff] %vm387, %v386
    %v396 = vld [vmem:[#allocation4] sm:$0xff]
    %v397 = vld [vmem:[#allocation4 + $0x8] sm:$0xff]
    %v398 = vld [vmem:[#allocation4 + $0x10] sm:$0xff]
    %v399 = vld [vmem:[#allocation4 + $0x18] sm:$0xff]
    %v400 = vld [vmem:[#allocation4 + $0x20] sm:$0xff]
    %v401 = vld [vmem:[#allocation4 + $0x28] sm:$0xff]
    %v402 = vld [vmem:[#allocation4 + $0x30] sm:$0xff]
    %v403 = vld [vmem:[#allocation4 + $0x38] sm:$0xff]
    %405 = vset.pattern.permute.xlu0 0
    %406 = vperm.xlu0 %405, %v260
    %v407 = vpop.permute.xlu0 %406
    %410 = vset.pattern.permute.xlu0 0
    %411 = vperm.xlu0 %410, %v262
    %v412 = vpop.permute.xlu0 %411
    %415 = vset.pattern.permute.xlu0 0
    %416 = vperm.xlu0 %415, %v264
    %v417 = vpop.permute.xlu0 %416
    %420 = vset.pattern.permute.xlu0 0
    %421 = vperm.xlu0 %420, %v266
    %v422 = vpop.permute.xlu0 %421
    %425 = vset.pattern.permute.xlu0 0
    %426 = vperm.xlu0 %425, %v268
    %v427 = vpop.permute.xlu0 %426
    %430 = vset.pattern.permute.xlu0 0
    %431 = vperm.xlu0 %430, %v270
    %v432 = vpop.permute.xlu0 %431
    %435 = vset.pattern.permute.xlu0 0
    %436 = vperm.xlu0 %435, %v272
    %v437 = vpop.permute.xlu0 %436
    %440 = vset.pattern.permute.xlu0 0
    %441 = vperm.xlu0 %440, %v274
    %v442 = vpop.permute.xlu0 %441
    %v444 = vmul.f32 %v407, %v396
    %v445 = vmul.f32 %v412, %v397
    %v446 = vmul.f32 %v417, %v398
    %v447 = vmul.f32 %v422, %v399
    %v448 = vmul.f32 %v427, %v400
    %v449 = vmul.f32 %v432, %v401
    %v450 = vmul.f32 %v437, %v402
    %v451 = vmul.f32 %v442, %v403
    %v452 = vpack.c.bf16 %v326, %v324
    %v453 = vpack.c.bf16 %v330, %v328
    %v454 = vpack.c.bf16 %v334, %v332
    %v455 = vpack.c.bf16 %v338, %v336
    %v456 = vld [vmem:[%s4] sm:$0xf]
    %v457 = vld [vmem:[%s4 + $0x4] sm:$0xf]
    %v458 = vld [vmem:[%s4 + $0x8] sm:$0xf]
    %v459 = vld [vmem:[%s4 + $0xc] sm:$0xf]
    %v460 = vld [vmem:[%s4 + $0x10] sm:$0xf]
    %v461 = vld [vmem:[%s4 + $0x14] sm:$0xf]
    %v462 = vld [vmem:[%s4 + $0x18] sm:$0xf]
    %v463 = vld [vmem:[%s4 + $0x1c] sm:$0xf]
    %v472 = vunpack.c.l.b16 %v456
    %v473 = vunpack.c.l.b16 %v457
    %v474 = vunpack.c.l.b16 %v458
    %v475 = vunpack.c.l.b16 %v459
    %v476 = vunpack.c.l.b16 %v460
    %v477 = vunpack.c.l.b16 %v461
    %v478 = vunpack.c.l.b16 %v462
    %v479 = vunpack.c.l.b16 %v463
    %v480 = vpack.c.b16 %v473, %v472
    %v481 = vpack.c.b16 %v475, %v474
    %v482 = vpack.c.b16 %v477, %v476
    %v483 = vpack.c.b16 %v479, %v478
    %v489 = vsel %vm218, %v452, 0
    %v492 = vsel %vm218, %v453, 0
    %v495 = vsel %vm218, %v454, 0
    %v498 = vsel %vm218, %v455, 0
    %500 = vmatprep.subr.bf16.mxu0 0
    %501 = vmatpush1.bf16.msra.mxu0 0
    %502 = vmatprep.subr.bf16.mxu0 0
    %503 = vmatpush1.bf16.msra.mxu0 0
    %504 = vmatprep.subr.bf16.mxu0 0
    %505 = vmatpush1.bf16.msra.mxu0 0
    %506 = vmatprep.subr.bf16.mxu0 0
    %507 = vmatpush1.bf16.msra.mxu0 0
    %508 = vmatprep.subr.bf16.mxu0 0
    %509 = vmatpush1.bf16.msra.mxu0 %v483
    %510 = vmatprep.subr.bf16.mxu0 0
    %511 = vmatpush1.bf16.msra.mxu0 %v482
    %512 = vmatprep.subr.bf16.mxu0 0
    %513 = vmatpush1.bf16.msra.mxu0 %v481
    %514 = vmatprep.subr.bf16.mxu0 0
    %515 = vmatpush1.bf16.msra.mxu0 %v480
    %516 = vmatprep.subr.bf16.mxu0 0
    %517 = vmatpush2.bf16.msra.mxu0 0
    %518 = vmatprep.subr.bf16.mxu0 0
    %519 = vmatpush2.bf16.msra.mxu0 0
    %520 = vmatprep.subr.bf16.mxu0 0
    %521 = vmatpush2.bf16.msra.mxu0 0
    %522 = vmatprep.subr.bf16.mxu0 0
    %523 = vmatpush2.bf16.msra.mxu0 0
    %524 = vmatprep.subr.bf16.mxu0 0
    %525 = vmatpush2.bf16.msra.mxu0 0
    %526 = vmatprep.subr.bf16.mxu0 0
    %527 = vmatpush2.bf16.msra.mxu0 0
    %528 = vmatprep.subr.bf16.mxu0 0
    %529 = vmatpush2.bf16.msra.mxu0 0
    %530 = vmatprep.subr.bf16.mxu0 0
    %531 = vmatpush2.bf16.msra.mxu0 0
    %532 = vmatprep.mubr.bf16.mxu0 0
    %533 = vmatmul.mubr.bf16.gmra.mxu0 %v489
    %v534 = vpop.f32.mrf.mxu0
    %v535 = vadd.f32 0.0, %v534
    %v536 = vpop.f32.mrf.mxu0
    %v537 = vpop.f32.mrf.mxu0
    %v538 = vadd.f32 0.0, %v537
    %v539 = vpop.f32.mrf.mxu0
    %540 = vmatprep.mubr.bf16.mxu0 0
    %541 = vmatmul.mubr.bf16.gmra.mxu0 %v492
    %v542 = vpop.f32.mrf.mxu0
    %v543 = vadd.f32 0.0, %v542
    %v544 = vpop.f32.mrf.mxu0
    %v545 = vpop.f32.mrf.mxu0
    %v546 = vadd.f32 0.0, %v545
    %v547 = vpop.f32.mrf.mxu0
    %548 = vmatprep.mubr.bf16.mxu0 0
    %549 = vmatmul.mubr.bf16.gmra.mxu0 %v495
    %v550 = vpop.f32.mrf.mxu0
    %v551 = vadd.f32 0.0, %v550
    %v552 = vpop.f32.mrf.mxu0
    %v553 = vpop.f32.mrf.mxu0
    %v554 = vadd.f32 0.0, %v553
    %v555 = vpop.f32.mrf.mxu0
    %556 = vmatprep.mubr.bf16.mxu0 0
    %557 = vmatmul.mubr.bf16.gmra.mxu0 %v498
    %v558 = vpop.f32.mrf.mxu0
    %v559 = vadd.f32 0.0, %v558
    %v560 = vpop.f32.mrf.mxu0
    %v561 = vpop.f32.mrf.mxu0
    %v562 = vadd.f32 0.0, %v561
    %v563 = vpop.f32.mrf.mxu0
    %564 = vdwg.mxu0
    %v565 = vadd.f32 %v444, %v535
    %v566 = vadd.f32 %v445, %v538
    %v567 = vadd.f32 %v446, %v543
    %v568 = vadd.f32 %v447, %v546
    %v569 = vadd.f32 %v448, %v551
    %v570 = vadd.f32 %v449, %v554
    %v571 = vadd.f32 %v450, %v559
    %v572 = vadd.f32 %v451, %v562
    %573 = vst [vmem:[#allocation4] sm:$0xff] %v565
    %574 = vst [vmem:[#allocation4 + $0x8] sm:$0xff] %v566
    %575 = vst [vmem:[#allocation4 + $0x10] sm:$0xff] %v567
    %576 = vst [vmem:[#allocation4 + $0x18] sm:$0xff] %v568
    %577 = vst [vmem:[#allocation4 + $0x20] sm:$0xff] %v569
    %578 = vst [vmem:[#allocation4 + $0x28] sm:$0xff] %v570
    %579 = vst [vmem:[#allocation4 + $0x30] sm:$0xff] %v571
    %580 = vst [vmem:[#allocation4 + $0x38] sm:$0xff] %v572
    %581 = vst.msk [vmem:[#allocation2] sm:$0xff] %vm387, %v243
    %582 = vst.msk [vmem:[#allocation2 + $0x8] sm:$0xff] %vm387, %v244
    %583 = vst.msk [vmem:[#allocation2 + $0x10] sm:$0xff] %vm387, %v245
    %584 = vst.msk [vmem:[#allocation2 + $0x18] sm:$0xff] %vm387, %v246
    %585 = vst.msk [vmem:[#allocation2 + $0x20] sm:$0xff] %vm387, %v247
    %586 = vst.msk [vmem:[#allocation2 + $0x28] sm:$0xff] %vm387, %v248
    %587 = vst.msk [vmem:[#allocation2 + $0x30] sm:$0xff] %vm387, %v249
    %588 = vst.msk [vmem:[#allocation2 + $0x38] sm:$0xff] %vm387, %v250
    // Predicated region
    $region30: #{tpu_custom_call.1} parent=1 // pred_check
      %p589 = pneg %p36
    $region31: #{tpu_custom_call.1} parent=1 // pred_check_branch
      %591 = sbr.rel (%p589) target = $region33
    $region32: #{tpu_custom_call.1} parent=1 // pred_region
      %v592 = vld [vmem:[#allocation4] sm:$0xff]
      %v593 = vld [vmem:[#allocation4 + $0x8] sm:$0xff]
      %v594 = vld [vmem:[#allocation4 + $0x10] sm:$0xff]
      %v595 = vld [vmem:[#allocation4 + $0x18] sm:$0xff]
      %v596 = vld [vmem:[#allocation4 + $0x20] sm:$0xff]
      %v597 = vld [vmem:[#allocation4 + $0x28] sm:$0xff]
      %v598 = vld [vmem:[#allocation4 + $0x30] sm:$0xff]
      %v599 = vld [vmem:[#allocation4 + $0x38] sm:$0xff]
      %v600 = vld [vmem:[#allocation3] sm:$0xff]
      %v601 = vld [vmem:[#allocation3 + $0x8] sm:$0xff]
      %v602 = vld [vmem:[#allocation3 + $0x10] sm:$0xff]
      %v603 = vld [vmem:[#allocation3 + $0x18] sm:$0xff]
      %v604 = vld [vmem:[#allocation3 + $0x20] sm:$0xff]
      %v605 = vld [vmem:[#allocation3 + $0x28] sm:$0xff]
      %v606 = vld [vmem:[#allocation3 + $0x30] sm:$0xff]
      %v607 = vld [vmem:[#allocation3 + $0x38] sm:$0xff]
      %v608 = vrcp.pop %v600
      %v609 = vrcp.pop %v601
      %v610 = vrcp.pop %v602
      %v611 = vrcp.pop %v603
      %v612 = vrcp.pop %v604
      %v613 = vrcp.pop %v605
      %v614 = vrcp.pop %v606
      %v615 = vrcp.pop %v607
      %617 = vset.pattern.permute.xlu0 0
      %618 = vperm.xlu0 %617, %v608
      %v619 = vpop.permute.xlu0 %618
      %622 = vset.pattern.permute.xlu0 0
      %623 = vperm.xlu0 %622, %v609
      %v624 = vpop.permute.xlu0 %623
      %627 = vset.pattern.permute.xlu0 0
      %628 = vperm.xlu0 %627, %v610
      %v629 = vpop.permute.xlu0 %628
      %632 = vset.pattern.permute.xlu0 0
      %633 = vperm.xlu0 %632, %v611
      %v634 = vpop.permute.xlu0 %633
      %637 = vset.pattern.permute.xlu0 0
      %638 = vperm.xlu0 %637, %v612
      %v639 = vpop.permute.xlu0 %638
      %642 = vset.pattern.permute.xlu0 0
      %643 = vperm.xlu0 %642, %v613
      %v644 = vpop.permute.xlu0 %643
      %647 = vset.pattern.permute.xlu0 0
      %648 = vperm.xlu0 %647, %v614
      %v649 = vpop.permute.xlu0 %648
      %652 = vset.pattern.permute.xlu0 0
      %653 = vperm.xlu0 %652, %v615
      %v654 = vpop.permute.xlu0 %653
      %v656 = vmul.f32 %v592, %v619
      %v657 = vmul.f32 %v593, %v624
      %v658 = vmul.f32 %v594, %v629
      %v659 = vmul.f32 %v595, %v634
      %v660 = vmul.f32 %v596, %v639
      %v661 = vmul.f32 %v597, %v644
      %v662 = vmul.f32 %v598, %v649
      %v663 = vmul.f32 %v599, %v654
      %vm664 = vcmp.gt.f32.partialorder %v656, 0.0
      %vm665 = vcmp.gt.f32.partialorder %v657, 0.0
      %vm666 = vcmp.gt.f32.partialorder %v658, 0.0
      %vm667 = vcmp.gt.f32.partialorder %v659, 0.0
      %vm668 = vcmp.gt.f32.partialorder %v660, 0.0
      %vm669 = vcmp.gt.f32.partialorder %v661, 0.0
      %vm670 = vcmp.gt.f32.partialorder %v662, 0.0
      %vm671 = vcmp.gt.f32.partialorder %v663, 0.0
      %v672 = vmin.f32 %v656, 0.0
      %v673 = vmin.f32 %v657, 0.0
      %v674 = vmin.f32 %v658, 0.0
      %v675 = vmin.f32 %v659, 0.0
      %v676 = vmin.f32 %v660, 0.0
      %v677 = vmin.f32 %v661, 0.0
      %v678 = vmin.f32 %v662, 0.0
      %v679 = vmin.f32 %v663, 0.0
      %v680 = vmul.f32 %v672, 1.442695
      %v681 = vpow.pop %v680
      %v682 = vmul.f32 %v673, 1.442695
      %v683 = vpow.pop %v682
      %v684 = vmul.f32 %v674, 1.442695
      %v685 = vpow.pop %v684
      %v686 = vmul.f32 %v675, 1.442695
      %v687 = vpow.pop %v686
      %v688 = vmul.f32 %v676, 1.442695
      %v689 = vpow.pop %v688
      %v690 = vmul.f32 %v677, 1.442695
      %v691 = vpow.pop %v690
      %v692 = vmul.f32 %v678, 1.442695
      %v693 = vpow.pop %v692
      %v694 = vmul.f32 %v679, 1.442695
      %v695 = vpow.pop %v694
      %v696 = vsub.f32 %v681, 1.0
      %v697 = vsub.f32 %v683, 1.0
      %v698 = vsub.f32 %v685, 1.0
      %v699 = vsub.f32 %v687, 1.0
      %v700 = vsub.f32 %v689, 1.0
      %v701 = vsub.f32 %v691, 1.0
      %v702 = vsub.f32 %v693, 1.0
      %v703 = vsub.f32 %v695, 1.0
      %v704 = vsel %vm664, %v656, %v696
      %v705 = vsel %vm665, %v657, %v697
      %v706 = vsel %vm666, %v658, %v698
      %v707 = vsel %vm667, %v659, %v699
      %v708 = vsel %vm668, %v660, %v700
      %v709 = vsel %vm669, %v661, %v701
      %v710 = vsel %vm670, %v662, %v702
      %v711 = vsel %vm671, %v663, %v703
      %712 = vst [vmem:[#allocation8] sm:$0xff] %v704
      %713 = vst [vmem:[#allocation8 + $0x8] sm:$0xff] %v705
      %714 = vst [vmem:[#allocation8 + $0x10] sm:$0xff] %v706
      %715 = vst [vmem:[#allocation8 + $0x18] sm:$0xff] %v707
      %716 = vst [vmem:[#allocation8 + $0x20] sm:$0xff] %v708
      %717 = vst [vmem:[#allocation8 + $0x28] sm:$0xff] %v709
      %718 = vst [vmem:[#allocation8 + $0x30] sm:$0xff] %v710
      %719 = vst [vmem:[#allocation8 + $0x38] sm:$0xff] %v711
    $region33: #{tpu_custom_call.1} parent=1 // pred_fallthru
      _
    // Predicated region
    $region34: #{tpu_custom_call.1} parent=1 // pred_check
      _
    $region35: #{tpu_custom_call.1} parent=1 // pred_check_branch
      %721 = sbr.rel (0) target = $region37
    $region36: #{tpu_custom_call.1} parent=1 // pred_region
      %s723 = ssub.s32 1024, 1024
      %724 = vsyncadd [#allocation7], %s723
      %s725 = sshll.u32 [#allocation8], 4
      %s726 = int_to_ptr.vmem [resolvable:$true] %s725
      %731 = dma.vmem_to_hbm [thread:$0]  %s726, 1024, %s5, [#allocation7], 128, 128, 8
    $region37: #{tpu_custom_call.1} parent=1 // pred_fallthru
      _
    // Predicated region
    $region38: #{tpu_custom_call.1} parent=1 // pred_check
      _
    $region39: #{tpu_custom_call.1} parent=1 // pred_check_branch
      %733 = sbr.rel (0) target = $region41
    $region40: #{tpu_custom_call.1} parent=1 // pred_region
      %734 = dma.done [#allocation7], 1024
    $region41: #{tpu_custom_call.1} parent=1 // pred_fallthru
      _
    %735 = vsyncpa [#allocation6], 1
    %736 = vsyncpa [#allocation7], 1

</llo_original>
